<compile_context>
chip_gen: v7x
topology: tpu7x:2x2x1
jax: 0.10.0
libtpu: 0.0.40
codegen_flags: <defaults>
</compile_context>

<pallas_src>
import functools

import jax
import jax.numpy as jnp
from jax.experimental import pallas as pl
from jax.experimental.pallas import tpu as pltpu


def _round_up(x, m):
    return (x + m - 1) // m * m


def _pick_tile(padded_dim, preferred):
    """Largest power-of-two tile <= preferred that divides padded_dim."""
    t = preferred
    while padded_dim % t != 0:
        t //= 2
    return t


def _linear_kernel(x_ref, w_ref, b_ref, o_ref, acc_ref):
    # x_ref: (tm, tk) bf16   w_ref: (tk, tn) bf16   b_ref: (1, tn) f32
    # o_ref: (tm, tn) f32    acc_ref: (tm, tn) f32 VMEM scratch
    k = pl.program_id(2)

    @pl.when(k == 0)
    def _():
        # Fold the bias into the accumulator init (saves a broadcasted VPU add
        # on every k step).
        acc_ref[...] = jnp.broadcast_to(b_ref[...], acc_ref.shape)

    acc_ref[...] += jnp.dot(x_ref[...], w_ref[...],
                            preferred_element_type=jnp.float32)

    @pl.when(k == pl.num_programs(2) - 1)
    def _():
        o_ref[...] = acc_ref[...].astype(o_ref.dtype)


@functools.partial(jax.jit, static_argnames=("d_out",))
def _pallas_linear(x, w_t_pad, b_pad, d_out):
    """y = x @ w_t + b with a tiled (M, N, K) Pallas matmul.

    x: (B, D_in) f32; w_t_pad: (K_pad, N_pad) bf16 (pre-transposed, pre-padded);
    b_pad: (1, N_pad) f32. Returns (B, d_out) f32.
    """
    B, D_in = x.shape
    K_pad, N_pad = w_t_pad.shape

    M_pad = _round_up(max(B, 1), 8)
    tm = _pick_tile(M_pad, 128)
    tk = _pick_tile(K_pad, 256)   # K_pad / N_pad are already 128-aligned
    tn = _pick_tile(N_pad, 256)

    # Pad activations to the tile grid; zero rows/cols contribute nothing.
    # (No-op pads are elided by XLA when shapes are already aligned.)
    x_p = jnp.pad(x, ((0, M_pad - B), (0, K_pad - D_in))).astype(jnp.bfloat16)

    grid = (M_pad // tm, N_pad // tn, K_pad // tk)

    out = pl.pallas_call(
        _linear_kernel,
        out_shape=jax.ShapeDtypeStruct((M_pad, N_pad), jnp.float32),
        grid=grid,
        in_specs=[
            pl.BlockSpec((tm, tk), lambda i, j, k: (i, k)),
            pl.BlockSpec((tk, tn), lambda i, j, k: (k, j)),
            pl.BlockSpec((1, tn), lambda i, j, k: (0, j)),
        ],
        out_specs=pl.BlockSpec((tm, tn), lambda i, j, k: (i, j)),
        scratch_shapes=[pltpu.VMEM((tm, tn), jnp.float32)],
        compiler_params=pltpu.CompilerParams(
            dimension_semantics=("parallel", "parallel", "arbitrary")),
    )(x_p, w_t_pad, b_pad)

    # Only slice when padding was actually added (static at trace time).
    if M_pad != B or N_pad != d_out:
        out = out[:B, :d_out]
    return out


class LinearBaseModel:
    """Synthetic base model: nn.Linear(d_in, d_out) with a Pallas matmul."""

    def __init__(self, d_in, d_out, key):
        k_w, k_b = jax.random.split(key)
        bound = 1.0 / (d_in ** 0.5)
        # PyTorch Linear stores weight as [d_out, d_in].
        self.weight = jax.random.uniform(
            k_w, (d_out, d_in), jnp.float32, minval=-bound, maxval=bound)
        self.bias = jax.random.uniform(
            k_b, (d_out,), jnp.float32, minval=-bound, maxval=bound)
        self.d_out = d_out

        # One-time glue (cached): transpose to [d_in, d_out], zero-pad K/N to a
        # multiple of 128 (lane-dense), cast weight to bf16 for the MXU.
        k_pad = _round_up(d_in, 128)
        n_pad = _round_up(d_out, 128)
        w_t = jnp.zeros((k_pad, n_pad), jnp.float32)
        w_t = w_t.at[:d_in, :d_out].set(self.weight.T)
        self.w_t_pad = w_t.astype(jnp.bfloat16)
        self.b_pad = jnp.zeros((1, n_pad), jnp.float32).at[0, :d_out].set(self.bias)

    def __call__(self, x):
        return _pallas_linear(x, self.w_t_pad, self.b_pad, self.d_out)


class WAdversaryWrapper:
    """JAX/Pallas port of the PyTorch WAdversaryWrapper."""

    def __init__(self, base_model):
        self.base_model = base_model
        self.c = jnp.ones((2,), dtype=jnp.float32)  # nn.Parameter(torch.ones(2))

    def get_constraint_multipliers(self):
        return self.c

    def forward(self, inputs):
        # Pure pass-through, exactly like the PyTorch module.
        return self.base_model(inputs)

    __call__ = forward


if __name__ == "__main__":
    key = jax.random.PRNGKey(0)
    k_model, k_x = jax.random.split(key)

    B, D_IN, D_OUT = 8, 32, 32
    base = LinearBaseModel(D_IN, D_OUT, k_model)
    model = WAdversaryWrapper(base)

    x = jax.random.normal(k_x, (B, D_IN), jnp.float32)

    y = model(x)
    y = jax.block_until_ready(y)

    # Reference check in plain JAX against the same bf16-quantized operands
    # the kernel intentionally feeds the MXU (f32 accumulation).
    x_q = x.astype(jnp.bfloat16).astype(jnp.float32)
    w_q = base.w_t_pad[:D_IN, :D_OUT].astype(jnp.float32)
    y_ref = jnp.dot(x_q, w_q, precision=jax.lax.Precision.HIGHEST) + base.bias

    assert y.shape == (B, D_OUT)
    assert jnp.allclose(y, y_ref, atol=1e-4, rtol=1e-4)
    assert jnp.all(model.get_constraint_multipliers() == 1.0)

    print("KERNEL_OK")
</pallas_src>

<mosaic_0001>
module attributes {stable_mosaic.version = 11 : i64} {
  func.func @_linear_kernel(%arg0: i32, %arg1: i32, %arg2: i32, %arg3: memref<8x128xbf16, #tpu.memory_space<vmem>>, %arg4: memref<128x128xbf16, #tpu.memory_space<vmem>>, %arg5: memref<1x128xf32, #tpu.memory_space<vmem>>, %arg6: memref<8x128xf32, #tpu.memory_space<vmem>>, %arg7: memref<8x128xf32, #tpu.memory_space<vmem>>) attributes {dimension_semantics = [#tpu.dimension_semantics<parallel>, #tpu.dimension_semantics<parallel>, #tpu.dimension_semantics<arbitrary>], iteration_bounds = array<i64: 1, 1, 1>, scalar_prefetch = 0 : i64, scratch_operands = 1 : i64, tpu.core_type = #tpu.core_type<tc>, window_params = [{transform_indices = @transform_0, window_bounds = array<i64: 8, 128>}, {transform_indices = @transform_1, window_bounds = array<i64: 128, 128>}, {transform_indices = @transform_2, window_bounds = array<i64: 1, 128>}, {transform_indices = @transform_3, window_bounds = array<i64: 8, 128>}]} {
    %c0_i32 = arith.constant 0 : i32
    %0 = arith.cmpi eq, %arg2, %c0_i32 : i32
    %1 = arith.extui %0 : i1 to i32
    %c0_i32_0 = arith.constant 0 : i32
    %2 = arith.cmpi ne, %1, %c0_i32_0 : i32
    scf.if %2 {
      %c0_10 = arith.constant 0 : index
      %c0_11 = arith.constant 0 : index
      %12 = vector.load %arg5[%c0_10, %c0_11] : memref<1x128xf32, #tpu.memory_space<vmem>>, vector<1x128xf32>
      %13 = vector.shape_cast %12 : vector<1x128xf32> to vector<1x128xf32>
      %14 = vector.broadcast %13 : vector<1x128xf32> to vector<8x128xf32>
      %c0_12 = arith.constant 0 : index
      %c0_13 = arith.constant 0 : index
      %15 = vector.load %arg7[%c0_12, %c0_13] : memref<8x128xf32, #tpu.memory_space<vmem>>, vector<8x128xf32>
      tpu.vector_store %arg7[%c0_12, %c0_13], %14 {strides = array<i32>} : memref<8x128xf32, #tpu.memory_space<vmem>>, vector<8x128xf32>,
    } else {
    }
    %c0 = arith.constant 0 : index
    %c0_1 = arith.constant 0 : index
    %3 = vector.load %arg7[%c0, %c0_1] : memref<8x128xf32, #tpu.memory_space<vmem>>, vector<8x128xf32>
    %c0_2 = arith.constant 0 : index
    %c0_3 = arith.constant 0 : index
    %4 = vector.load %arg3[%c0_2, %c0_3] : memref<8x128xbf16, #tpu.memory_space<vmem>>, vector<8x128xbf16>
    %c0_4 = arith.constant 0 : index
    %c0_5 = arith.constant 0 : index
    %5 = vector.load %arg4[%c0_4, %c0_5] : memref<128x128xbf16, #tpu.memory_space<vmem>>, vector<128x128xbf16>
    %cst = arith.constant dense<0.000000e+00> : vector<8x128xf32>
    %6 = tpu.matmul %4, %5, %cst {dimension_numbers = #tpu.dot_dimension_numbers<[1], [0], [0], [1], [0, 0, 1, 1], [], []>} : vector<8x128xbf16>, vector<128x128xbf16>, vector<8x128xf32> -> vector<8x128xf32>
    %7 = arith.addf %3, %6 : vector<8x128xf32>
    %c0_6 = arith.constant 0 : index
    %c0_7 = arith.constant 0 : index
    %8 = vector.load %arg7[%c0_6, %c0_7] : memref<8x128xf32, #tpu.memory_space<vmem>>, vector<8x128xf32>
    tpu.vector_store %arg7[%c0_6, %c0_7], %7 {strides = array<i32>} : memref<8x128xf32, #tpu.memory_space<vmem>>, vector<8x128xf32>,
    %c0_i32_8 = arith.constant 0 : i32
    %9 = arith.cmpi eq, %arg2, %c0_i32_8 : i32
    %10 = arith.extui %9 : i1 to i32
    %c0_i32_9 = arith.constant 0 : i32
    %11 = arith.cmpi ne, %10, %c0_i32_9 : i32
    scf.if %11 {
      %c0_10 = arith.constant 0 : index
      %c0_11 = arith.constant 0 : index
      %12 = vector.load %arg7[%c0_10, %c0_11] : memref<8x128xf32, #tpu.memory_space<vmem>>, vector<8x128xf32>
      %c0_12 = arith.constant 0 : index
      %c0_13 = arith.constant 0 : index
      %13 = vector.load %arg6[%c0_12, %c0_13] : memref<8x128xf32, #tpu.memory_space<vmem>>, vector<8x128xf32>
      tpu.vector_store %arg6[%c0_12, %c0_13], %12 {strides = array<i32>} : memref<8x128xf32, #tpu.memory_space<vmem>>, vector<8x128xf32>,
    } else {
    }
    return
  }
  func.func @transform_0(%arg0: i32, %arg1: i32, %arg2: i32) -> (i32, i32) {
    %c0_i32 = arith.constant 0 : i32
    return %arg0, %arg2 : i32, i32
  }
  func.func @transform_1(%arg0: i32, %arg1: i32, %arg2: i32) -> (i32, i32) {
    %c0_i32 = arith.constant 0 : i32
    return %arg2, %arg1 : i32, i32
  }
  func.func @transform_2(%arg0: i32, %arg1: i32, %arg2: i32) -> (i32, i32) {
    %c0_i32 = arith.constant 0 : i32
    %c0_i32_0 = arith.constant 0 : i32
    return %c0_i32, %arg1 : i32, i32
  }
  func.func @transform_3(%arg0: i32, %arg1: i32, %arg2: i32) -> (i32, i32) {
    %c0_i32 = arith.constant 0 : i32
    return %arg0, %arg1 : i32, i32
  }
}

</mosaic_0001>

<llo_original>
// kernel: _pallas_linear.1
$region0: #{_pallas_linear.1}
  #allocation0 [shape = 'u32[]', space=smem, size = 0x4, offset = 0x4, fixed_abs, tag = 'smem constant byte address 0x4 - core index']
  #allocation1 [shape = 'u32[144,128]{1,0:T(1,128)}', space=vmem, size = 0x12000, scoped, tag = 'internal scratch']
  #allocation2 [shape = 'f32[8,128]{1,0:T(8,128)}', space=vmem, size = 0x1000, scoped, tag = 'scratch operand']
  %s0 = inlined_call_operand.vmem [shape: bf16[8,128], index: 0, kind: input, shape index: {}]
  %s1 = inlined_call_operand.hbm [shape: bf16[128,128], index: 1, kind: input, shape index: {}]
  %s2 = inlined_call_operand.vmem [shape: f32[1,128], index: 2, kind: input, shape index: {}]
  %s3 = inlined_call_operand.hbm [shape: f32[8,128], index: 3, kind: output, shape index: {}]
  %s4 = sld [smem:[#allocation0]]
  $region34: #{_pallas_linear.1} parent=0
    _
  %s6 = ssub.s32 1, %s4
  %s7 = scalar_select 0, %s6, %s4
  $region1: #{_pallas_linear.1} parent=0
    #allocation3 [shape = 'u8[32768]{0}', space=vmem, size = 0x8000, scoped, tag = 'input window, operand 1, single buffered']
    #allocation4 [shape = 's32[1]{0}', space=sflag, size = 0x4, scoped, tag = 'scoped memory for _pallas_linear.1']
    #allocation5 [shape = 's32[1]{0}', space=sflag, size = 0x4, scoped, tag = 'scoped memory for _pallas_linear.1']
    #allocation6 [shape = 'u8[4096]{0}', space=vmem, size = 0x1000, scoped, tag = 'output window, operand 0, single buffered']
    %8 = vsyncpa [#allocation4], 0
    %9 = vsyncpa [#allocation5], 0
    // Predicated region
    $region2: #{_pallas_linear.1} parent=1 // pred_check
      _
    $region3: #{_pallas_linear.1} parent=1 // pred_check_branch
      %11 = sbr.rel (0) target = $region5
    $region4: #{_pallas_linear.1} parent=1 // pred_region
      _
    $region5: #{_pallas_linear.1} parent=1 // pred_fallthru
      _
    // Predicated region
    $region6: #{_pallas_linear.1} parent=1 // pred_check
      _
    $region7: #{_pallas_linear.1} parent=1 // pred_check_branch
      %13 = sbr.rel (0) target = $region9
    $region8: #{_pallas_linear.1} parent=1 // pred_region
      %s15 = ssub.s32 1024, 1024
      %16 = vsyncadd [#allocation4], %s15
      %s17 = sshll.u32 [#allocation3], 4
      %s18 = int_to_ptr.vmem [resolvable:$true] %s17
      %23 = dma.hbm_to_vmem [thread:$0]  %s1, 1024, %s18, [#allocation4], 64, 64, 4
    $region9: #{_pallas_linear.1} parent=1 // pred_fallthru
      _
    // Predicated region
    $region10: #{_pallas_linear.1} parent=1 // pred_check
      _
    $region11: #{_pallas_linear.1} parent=1 // pred_check_branch
      %25 = sbr.rel (0) target = $region13
    $region12: #{_pallas_linear.1} parent=1 // pred_region
      _
    $region13: #{_pallas_linear.1} parent=1 // pred_fallthru
      _
    // Predicated region
    $region14: #{_pallas_linear.1} parent=1 // pred_check
      _
    $region15: #{_pallas_linear.1} parent=1 // pred_check_branch
      %27 = sbr.rel (0) target = $region17
    $region16: #{_pallas_linear.1} parent=1 // pred_region
      %28 = dma.done [#allocation4], 1024
    $region17: #{_pallas_linear.1} parent=1 // pred_fallthru
      _
    %p30 = scmp.eq.s32.totalorder 0, 0
    // Predicated region
    $region18: #{_pallas_linear.1} parent=1 // pred_check
      %p31 = pneg %p30
    $region19: #{_pallas_linear.1} parent=1 // pred_check_branch
      %33 = sbr.rel (%p31) target = $region21
    $region20: #{_pallas_linear.1} parent=1 // pred_region
      %v34 = vld [vmem:[%s2] sm:$0x1]
      %v36 = vlaneseq
      %v37 = vshrl.u32 %v36, 7
      %v38 = vsub.s32 0, %v37
      %v39 = vrot.slane %v34, %v38
      %41 = vst [vmem:[#allocation2] sm:$0xff] %v39
    $region21: #{_pallas_linear.1} parent=1 // pred_fallthru
      _
    %v42 = vld [vmem:[#allocation2] sm:$0xff]
    %v43 = vld [vmem:[%s0] sm:$0xf]
    %v44 = vld [vmem:[#allocation3] sm:$0xf]
    %v45 = vld [vmem:[#allocation3 + $0x4] sm:$0xf]
    %v46 = vld [vmem:[#allocation3 + $0x8] sm:$0xf]
    %v47 = vld [vmem:[#allocation3 + $0xc] sm:$0xf]
    %v48 = vld [vmem:[#allocation3 + $0x10] sm:$0xf]
    %v49 = vld [vmem:[#allocation3 + $0x14] sm:$0xf]
    %v50 = vld [vmem:[#allocation3 + $0x18] sm:$0xf]
    %v51 = vld [vmem:[#allocation3 + $0x1c] sm:$0xf]
    %v52 = vld [vmem:[#allocation3 + $0x20] sm:$0xf]
    %v53 = vld [vmem:[#allocation3 + $0x24] sm:$0xf]
    %v54 = vld [vmem:[#allocation3 + $0x28] sm:$0xf]
    %v55 = vld [vmem:[#allocation3 + $0x2c] sm:$0xf]
    %v56 = vld [vmem:[#allocation3 + $0x30] sm:$0xf]
    %v57 = vld [vmem:[#allocation3 + $0x34] sm:$0xf]
    %v58 = vld [vmem:[#allocation3 + $0x38] sm:$0xf]
    %v59 = vld [vmem:[#allocation3 + $0x3c] sm:$0xf]
    %v76 = vunpack.c.l.b16 %v44
    %v77 = vunpack.c.l.b16 %v45
    %v78 = vunpack.c.l.b16 %v46
    %v79 = vunpack.c.l.b16 %v47
    %v80 = vunpack.c.l.b16 %v48
    %v81 = vunpack.c.l.b16 %v49
    %v82 = vunpack.c.l.b16 %v50
    %v83 = vunpack.c.l.b16 %v51
    %v84 = vunpack.c.l.b16 %v52
    %v85 = vunpack.c.l.b16 %v53
    %v86 = vunpack.c.l.b16 %v54
    %v87 = vunpack.c.l.b16 %v55
    %v88 = vunpack.c.l.b16 %v56
    %v89 = vunpack.c.l.b16 %v57
    %v90 = vunpack.c.l.b16 %v58
    %v91 = vunpack.c.l.b16 %v59
    %v92 = vpack.c.b16 %v77, %v76
    %v93 = vpack.c.b16 %v79, %v78
    %v94 = vpack.c.b16 %v81, %v80
    %v95 = vpack.c.b16 %v83, %v82
    %v96 = vpack.c.b16 %v85, %v84
    %v97 = vpack.c.b16 %v87, %v86
    %v98 = vpack.c.b16 %v89, %v88
    %v99 = vpack.c.b16 %v91, %v90
    %108 = vmatprep.subr.bf16.mxu0 0
    %109 = vmatpush1.bf16.msra.mxu0 %v92
    %110 = vmatprep.subr.bf16.mxu0 0
    %111 = vmatpush1.bf16.msra.mxu0 %v93
    %112 = vmatprep.subr.bf16.mxu0 0
    %113 = vmatpush1.bf16.msra.mxu0 %v94
    %114 = vmatprep.subr.bf16.mxu0 0
    %115 = vmatpush1.bf16.msra.mxu0 %v95
    %116 = vmatprep.subr.bf16.mxu0 0
    %117 = vmatpush1.bf16.msra.mxu0 %v96
    %118 = vmatprep.subr.bf16.mxu0 0
    %119 = vmatpush1.bf16.msra.mxu0 %v97
    %120 = vmatprep.subr.bf16.mxu0 0
    %121 = vmatpush1.bf16.msra.mxu0 %v98
    %122 = vmatprep.subr.bf16.mxu0 0
    %123 = vmatpush1.bf16.msra.mxu0 %v99
    %124 = vmatprep.subr.bf16.mxu0 0
    %125 = vmatpush1.bf16.msra.mxu0 0
    %126 = vmatprep.subr.bf16.mxu0 0
    %127 = vmatpush1.bf16.msra.mxu0 0
    %128 = vmatprep.subr.bf16.mxu0 0
    %129 = vmatpush1.bf16.msra.mxu0 0
    %130 = vmatprep.subr.bf16.mxu0 0
    %131 = vmatpush1.bf16.msra.mxu0 0
    %132 = vmatprep.subr.bf16.mxu0 0
    %133 = vmatpush1.bf16.msra.mxu0 0
    %134 = vmatprep.subr.bf16.mxu0 0
    %135 = vmatpush1.bf16.msra.mxu0 0
    %136 = vmatprep.subr.bf16.mxu0 0
    %137 = vmatpush1.bf16.msra.mxu0 0
    %138 = vmatprep.subr.bf16.mxu0 0
    %139 = vmatpush1.bf16.msra.mxu0 0
    %140 = vmatprep.mubr.bf16.mxu0 0
    %141 = vmatmul.mubr.bf16.gmra.mrb[0].mxu0 %v43
    %v142 = vpop.f32.mrb[0].mxu0
    %v143 = vadd.f32 0.0, %v142
    %v144 = vpop.f32.mrb[0].mxu0
    %v145 = vpop.f32.mrb[0].mxu0
    %v146 = vpop.f32.mrb[0].mxu0
    %147 = vdwg.mxu0
    %v148 = vadd.f32 %v42, %v143
    %149 = vst [vmem:[#allocation2] sm:$0xff] %v148
    // Predicated region
    $region22: #{_pallas_linear.1} parent=1 // pred_check
      %p150 = pneg %p30
    $region23: #{_pallas_linear.1} parent=1 // pred_check_branch
      %152 = sbr.rel (%p150) target = $region25
    $region24: #{_pallas_linear.1} parent=1 // pred_region
      %v153 = vld [vmem:[#allocation2] sm:$0xff]
      %154 = vst [vmem:[#allocation6] sm:$0xff] %v153
    $region25: #{_pallas_linear.1} parent=1 // pred_fallthru
      _
    // Predicated region
    $region26: #{_pallas_linear.1} parent=1 // pred_check
      _
    $region27: #{_pallas_linear.1} parent=1 // pred_check_branch
      %156 = sbr.rel (0) target = $region29
    $region28: #{_pallas_linear.1} parent=1 // pred_region
      %s158 = ssub.s32 128, 128
      %159 = vsyncadd [#allocation5], %s158
      %s161 = sshll.u32 [#allocation6], 4
      %s162 = int_to_ptr.vmem [resolvable:$true] %s161
      %164 = dma.vmem_to_hbm [thread:$0]  %s162, 128, %s3, [#allocation5]
    $region29: #{_pallas_linear.1} parent=1 // pred_fallthru
      _
    // Predicated region
    $region30: #{_pallas_linear.1} parent=1 // pred_check
      _
    $region31: #{_pallas_linear.1} parent=1 // pred_check_branch
      %166 = sbr.rel (0) target = $region33
    $region32: #{_pallas_linear.1} parent=1 // pred_region
      %167 = dma.done [#allocation5], 128
    $region33: #{_pallas_linear.1} parent=1 // pred_fallthru
      _
    %168 = vsyncpa [#allocation4], 1
    %169 = vsyncpa [#allocation5], 1

</llo_original>
